<compile_context>
chip_gen: v5e
topology: v5e:2x2
jax: 0.10.0
libtpu: 0.0.40
codegen_flags: <defaults>
</compile_context>

<pallas_src>
import jax
import jax.numpy as jnp
from jax.experimental import pallas as pl
from jax.experimental.pallas import tpu as pltpu

_LANE = 128
_BF16_SUBLANE = 16  # bf16 packs 16 rows per vreg


def _round_up(n, m):
    return ((n + m - 1) // m) * m


def _cdiv(a, b):
    return (a + b - 1) // b


def _critic_kernel(x_ref, w1_ref, b1_ref, w2_ref, b2_ref, w3_ref, b3_ref, o_ref):
    """Fused 3-layer MLP on one batch tile.

    x_ref:  (tile_b, input_size) f32   -- cast to bf16 in-kernel for the MXU
    w*_ref: bf16 weights, hidden dim zero-padded to a lane multiple (128)
    b*_ref: f32 biases, added to the f32 MXU accumulator on the VPU
    o_ref:  (tile_b, output_size) f32  -- narrow, unpadded output
    """
    cdt = w1_ref.dtype  # bf16
    x = x_ref[...].astype(cdt)
    h1 = jnp.dot(x, w1_ref[...], preferred_element_type=jnp.float32) + b1_ref[...]
    h1 = jnp.maximum(h1, 0.0).astype(cdt)
    h2 = jnp.dot(h1, w2_ref[...], preferred_element_type=jnp.float32) + b2_ref[...]
    h2 = jnp.maximum(h2, 0.0).astype(cdt)
    out = jnp.dot(h2, w3_ref[...], preferred_element_type=jnp.float32) + b3_ref[...]
    o_ref[...] = out.astype(o_ref.dtype)


def pack_critic_params(params, compute_dtype=jnp.bfloat16):
    """One-time packing (call at init, NOT per forward): zero-pad the hidden dim to a
    lane multiple and cast weights to bf16 for the MXU.  Biases stay f32.  Zero-padded
    hidden lanes stay exactly zero through matmul + bias + ReLU, so they contribute
    nothing downstream."""
    input_size, hidden_dim = params["w1"].shape
    output_size = params["w3"].shape[1]
    h_p = _round_up(hidden_dim, _LANE)

    w1 = jnp.zeros((input_size, h_p), jnp.float32).at[:, :hidden_dim].set(params["w1"])
    w2 = jnp.zeros((h_p, h_p), jnp.float32).at[:hidden_dim, :hidden_dim].set(params["w2"])
    w3 = jnp.zeros((h_p, output_size), jnp.float32).at[:hidden_dim, :].set(params["w3"])
    b1 = jnp.zeros((1, h_p), jnp.float32).at[:, :hidden_dim].set(params["b1"])
    b2 = jnp.zeros((1, h_p), jnp.float32).at[:, :hidden_dim].set(params["b2"])
    b3 = params["b3"].astype(jnp.float32)

    return {
        "w1": w1.astype(compute_dtype),
        "w2": w2.astype(compute_dtype),
        "w3": w3.astype(compute_dtype),
        "b1": b1, "b2": b2, "b3": b3,
    }


@jax.jit
def critic_net_forward(obs, packed):
    """obs: [B, input_size] f32.  packed: output of pack_critic_params.
    Returns [B, output_size] f32."""
    B, input_size = obs.shape
    h_p = packed["w2"].shape[0]
    output_size = packed["w3"].shape[1]

    # --- batch tiling --------------------------------------------------------
    # Big tiles amortize the ~0.35 us per-grid-step pipeline overhead; 16-row multiples
    # for bf16 sublane packing.  tile_b derives from ceil(B / n_tiles) so b_pad never
    # overshoots by more than ~n_tiles*16 rows.  When more than one tile is needed we
    # force >= 4 steps so v7x's two TensorCores each pipeline >= 2 steps.
    cap = 4096
    n_tiles = _cdiv(B, cap)
    if n_tiles > 1:
        n_tiles = max(n_tiles, 4)
    tile_b = _round_up(_cdiv(B, n_tiles), _BF16_SUBLANE)
    b_pad = n_tiles * tile_b

    x = obs if b_pad == B else jnp.pad(obs, ((0, b_pad - B), (0, 0)))

    # --- VMEM budget (no double counting) ------------------------------------
    bf, f32 = 2, 4
    w_bytes = 2 * ((input_size * h_p + h_p * h_p + h_p * output_size) * bf
                   + (2 * h_p + output_size) * f32)            # weights/biases, 2 bufs
    io_bytes = 2 * tile_b * (input_size + output_size) * f32   # obs/out tiles, 2 bufs
    tmp_bytes = tile_b * (h_p * (2 * f32 + 2 * bf)              # h1/h2 f32 + bf16 casts
                          + input_size * bf + output_size * f32)
    budget = int(1.5 * (w_bytes + io_bytes + tmp_bytes))
    vmem_limit = min(max(budget, 16 << 20), 32 << 20)  # <= 32 MiB: safe on v7x's 64 MiB

    out = pl.pallas_call(
        _critic_kernel,
        out_shape=jax.ShapeDtypeStruct((b_pad, output_size), jnp.float32),
        grid_spec=pltpu.PrefetchScalarGridSpec(
            num_scalar_prefetch=0,
            grid=(n_tiles,),
            in_specs=[
                pl.BlockSpec((tile_b, input_size), lambda i: (i, 0)),  # obs tile (pipelined)
                pl.BlockSpec((input_size, h_p), lambda i: (0, 0)),     # weights/biases:
                pl.BlockSpec((1, h_p), lambda i: (0, 0)),              #   constant index ->
                pl.BlockSpec((h_p, h_p), lambda i: (0, 0)),            #   VMEM-resident,
                pl.BlockSpec((1, h_p), lambda i: (0, 0)),              #   DMA'd once
                pl.BlockSpec((h_p, output_size), lambda i: (0, 0)),
                pl.BlockSpec((1, output_size), lambda i: (0, 0)),
            ],
            out_specs=pl.BlockSpec((tile_b, output_size), lambda i: (i, 0)),
        ),
        compiler_params=pltpu.CompilerParams(
            dimension_semantics=("parallel",),  # megacore-shard batch tiles on v7x
            vmem_limit_bytes=vmem_limit,
        ),
    )(x, packed["w1"], packed["b1"], packed["w2"], packed["b2"],
      packed["w3"], packed["b3"])

    return out if b_pad == B else out[:B]


def init_critic_params(key, input_size, output_size, hidden_dim):
    """Deterministic init mirroring nn.Linear defaults: U(-1/sqrt(fan_in), +1/sqrt(fan_in)).
    Weights stored [in_features, out_features] (transposed vs PyTorch), biases [1, out]."""
    keys = jax.random.split(key, 6)

    def linear(kw, kb, fan_in, fan_out):
        bound = 1.0 / jnp.sqrt(jnp.float32(fan_in))
        w = jax.random.uniform(kw, (fan_in, fan_out), jnp.float32, -bound, bound)
        b = jax.random.uniform(kb, (1, fan_out), jnp.float32, -bound, bound)
        return w, b

    w1, b1 = linear(keys[0], keys[1], input_size, hidden_dim)
    w2, b2 = linear(keys[2], keys[3], hidden_dim, hidden_dim)
    w3, b3 = linear(keys[4], keys[5], hidden_dim, output_size)
    return {"w1": w1, "b1": b1, "w2": w2, "b2": b2, "w3": w3, "b3": b3}


def critic_net_reference(obs, p, emulate_bf16=False):
    """Pure-JAX reference. With emulate_bf16=True, mirrors the kernel numerics
    (bf16 matmul inputs, f32 accumulation, f32 bias add + ReLU, per-layer bf16 re-cast)."""
    if emulate_bf16:
        c = lambda a: a.astype(jnp.bfloat16)
        x = c(obs)
        h1 = jnp.maximum(
            jnp.dot(x, c(p["w1"]), preferred_element_type=jnp.float32) + p["b1"], 0.0)
        h2 = jnp.maximum(
            jnp.dot(c(h1), c(p["w2"]), preferred_element_type=jnp.float32) + p["b2"], 0.0)
        return jnp.dot(c(h2), c(p["w3"]), preferred_element_type=jnp.float32) + p["b3"]
    h1 = jnp.maximum(obs @ p["w1"] + p["b1"], 0.0)
    h2 = jnp.maximum(h1 @ p["w2"] + p["b2"], 0.0)
    return h2 @ p["w3"] + p["b3"]


if __name__ == "__main__":
    # Demo-sized problem consistent with the PyTorch module. (At this size the kernel is
    # launch-overhead bound; the tiling/residency structure pays off at large batch.)
    input_size, output_size, hidden_dim = 16, 4, 32
    batch = 8

    key = jax.random.PRNGKey(0)
    k_obs, k_params = jax.random.split(key)
    obs = jax.random.normal(k_obs, (batch, input_size), jnp.float32)
    params = init_critic_params(k_params, input_size, output_size, hidden_dim)

    packed = pack_critic_params(params)   # one-time packing, outside the hot path

    out = critic_net_forward(obs, packed)
    out = jax.block_until_ready(out)

    assert out.shape == (batch, output_size), out.shape

    ref_bf16 = critic_net_reference(obs, params, emulate_bf16=True).astype(jnp.float32)
    ref_f32 = critic_net_reference(obs, params, emulate_bf16=False)
    assert jnp.allclose(out, ref_bf16, atol=2e-3, rtol=2e-3), "mismatch vs bf16-emulated reference"
    assert jnp.allclose(out, ref_f32, atol=5e-2, rtol=5e-2), "mismatch vs f32 reference"

    print("KERNEL_OK")
</pallas_src>

<mosaic_0001>
module attributes {stable_mosaic.version = 11 : i64} {
  func.func @_critic_kernel(%arg0: i32, %arg1: memref<16x16xf32, #tpu.memory_space<vmem>>, %arg2: memref<16x128xbf16, #tpu.memory_space<vmem>>, %arg3: memref<1x128xf32, #tpu.memory_space<vmem>>, %arg4: memref<128x128xbf16, #tpu.memory_space<vmem>>, %arg5: memref<1x128xf32, #tpu.memory_space<vmem>>, %arg6: memref<128x4xbf16, #tpu.memory_space<vmem>>, %arg7: memref<1x4xf32, #tpu.memory_space<vmem>>, %arg8: memref<16x4xf32, #tpu.memory_space<vmem>>) attributes {dimension_semantics = [#tpu.dimension_semantics<parallel>], iteration_bounds = array<i64: 1>, scalar_prefetch = 0 : i64, scratch_operands = 0 : i64, tpu.core_type = #tpu.core_type<tc>, window_params = [{transform_indices = @transform_0, window_bounds = array<i64: 16, 16>}, {pipeline_mode = #tpu.pipeline_mode<synchronous>, transform_indices = @transform_1, window_bounds = array<i64: 16, 128>}, {pipeline_mode = #tpu.pipeline_mode<synchronous>, transform_indices = @transform_2, window_bounds = array<i64: 1, 128>}, {pipeline_mode = #tpu.pipeline_mode<synchronous>, transform_indices = @transform_3, window_bounds = array<i64: 128, 128>}, {pipeline_mode = #tpu.pipeline_mode<synchronous>, transform_indices = @transform_4, window_bounds = array<i64: 1, 128>}, {pipeline_mode = #tpu.pipeline_mode<synchronous>, transform_indices = @transform_5, window_bounds = array<i64: 128, 4>}, {pipeline_mode = #tpu.pipeline_mode<synchronous>, transform_indices = @transform_6, window_bounds = array<i64: 1, 4>}, {transform_indices = @transform_7, window_bounds = array<i64: 16, 4>}]} {
    %c0 = arith.constant 0 : index
    %c0_0 = arith.constant 0 : index
    %0 = vector.load %arg1[%c0, %c0_0] : memref<16x16xf32, #tpu.memory_space<vmem>>, vector<16x16xf32>
    %1 = arith.truncf %0 : vector<16x16xf32> to vector<16x16xbf16>
    %c0_1 = arith.constant 0 : index
    %c0_2 = arith.constant 0 : index
    %2 = vector.load %arg2[%c0_1, %c0_2] : memref<16x128xbf16, #tpu.memory_space<vmem>>, vector<16x128xbf16>
    %cst = arith.constant dense<0.000000e+00> : vector<16x128xf32>
    %3 = tpu.matmul %1, %2, %cst {dimension_numbers = #tpu.dot_dimension_numbers<[1], [0], [0], [1], [0, 0, 1, 1], [], []>} : vector<16x16xbf16>, vector<16x128xbf16>, vector<16x128xf32> -> vector<16x128xf32>
    %c0_3 = arith.constant 0 : index
    %c0_4 = arith.constant 0 : index
    %4 = vector.load %arg3[%c0_3, %c0_4] : memref<1x128xf32, #tpu.memory_space<vmem>>, vector<1x128xf32>
    %5 = vector.broadcast %4 : vector<1x128xf32> to vector<16x128xf32>
    %6 = arith.addf %3, %5 : vector<16x128xf32>
    %cst_5 = arith.constant 0.000000e+00 : f32
    %7 = vector.broadcast %cst_5 : f32 to vector<16x128xf32>
    %8 = arith.maximumf %6, %7 : vector<16x128xf32>
    %9 = arith.truncf %8 : vector<16x128xf32> to vector<16x128xbf16>
    %c0_6 = arith.constant 0 : index
    %c0_7 = arith.constant 0 : index
    %10 = vector.load %arg4[%c0_6, %c0_7] : memref<128x128xbf16, #tpu.memory_space<vmem>>, vector<128x128xbf16>
    %cst_8 = arith.constant dense<0.000000e+00> : vector<16x128xf32>
    %11 = tpu.matmul %9, %10, %cst_8 {dimension_numbers = #tpu.dot_dimension_numbers<[1], [0], [0], [1], [0, 0, 1, 1], [], []>} : vector<16x128xbf16>, vector<128x128xbf16>, vector<16x128xf32> -> vector<16x128xf32>
    %c0_9 = arith.constant 0 : index
    %c0_10 = arith.constant 0 : index
    %12 = vector.load %arg5[%c0_9, %c0_10] : memref<1x128xf32, #tpu.memory_space<vmem>>, vector<1x128xf32>
    %13 = vector.broadcast %12 : vector<1x128xf32> to vector<16x128xf32>
    %14 = arith.addf %11, %13 : vector<16x128xf32>
    %cst_11 = arith.constant 0.000000e+00 : f32
    %15 = vector.broadcast %cst_11 : f32 to vector<16x128xf32>
    %16 = arith.maximumf %14, %15 : vector<16x128xf32>
    %17 = arith.truncf %16 : vector<16x128xf32> to vector<16x128xbf16>
    %c0_12 = arith.constant 0 : index
    %c0_13 = arith.constant 0 : index
    %18 = vector.load %arg6[%c0_12, %c0_13] : memref<128x4xbf16, #tpu.memory_space<vmem>>, vector<128x4xbf16>
    %cst_14 = arith.constant dense<0.000000e+00> : vector<16x4xf32>
    %19 = tpu.matmul %17, %18, %cst_14 {dimension_numbers = #tpu.dot_dimension_numbers<[1], [0], [0], [1], [0, 0, 1, 1], [], []>} : vector<16x128xbf16>, vector<128x4xbf16>, vector<16x4xf32> -> vector<16x4xf32>
    %c0_15 = arith.constant 0 : index
    %c0_16 = arith.constant 0 : index
    %20 = vector.load %arg7[%c0_15, %c0_16] : memref<1x4xf32, #tpu.memory_space<vmem>>, vector<1x4xf32>
    %21 = vector.broadcast %20 : vector<1x4xf32> to vector<16x4xf32>
    %22 = arith.addf %19, %21 : vector<16x4xf32>
    %c0_17 = arith.constant 0 : index
    %c0_18 = arith.constant 0 : index
    %23 = vector.load %arg8[%c0_17, %c0_18] : memref<16x4xf32, #tpu.memory_space<vmem>>, vector<16x4xf32>
    tpu.vector_store %arg8[%c0_17, %c0_18], %22 {strides = array<i32>} : memref<16x4xf32, #tpu.memory_space<vmem>>, vector<16x4xf32>,
    return
  }
  func.func @transform_0(%arg0: i32) -> (i32, i32) {
    %c0_i32 = arith.constant 0 : i32
    %c0_i32_0 = arith.constant 0 : i32
    return %arg0, %c0_i32 : i32, i32
  }
  func.func @transform_1(%arg0: i32) -> (i32, i32) {
    %c0_i32 = arith.constant 0 : i32
    %c0_i32_0 = arith.constant 0 : i32
    %c0_i32_1 = arith.constant 0 : i32
    return %c0_i32, %c0_i32_0 : i32, i32
  }
  func.func @transform_2(%arg0: i32) -> (i32, i32) {
    %c0_i32 = arith.constant 0 : i32
    %c0_i32_0 = arith.constant 0 : i32
    %c0_i32_1 = arith.constant 0 : i32
    return %c0_i32, %c0_i32_0 : i32, i32
  }
  func.func @transform_3(%arg0: i32) -> (i32, i32) {
    %c0_i32 = arith.constant 0 : i32
    %c0_i32_0 = arith.constant 0 : i32
    %c0_i32_1 = arith.constant 0 : i32
    return %c0_i32, %c0_i32_0 : i32, i32
  }
  func.func @transform_4(%arg0: i32) -> (i32, i32) {
    %c0_i32 = arith.constant 0 : i32
    %c0_i32_0 = arith.constant 0 : i32
    %c0_i32_1 = arith.constant 0 : i32
    return %c0_i32, %c0_i32_0 : i32, i32
  }
  func.func @transform_5(%arg0: i32) -> (i32, i32) {
    %c0_i32 = arith.constant 0 : i32
    %c0_i32_0 = arith.constant 0 : i32
    %c0_i32_1 = arith.constant 0 : i32
    return %c0_i32, %c0_i32_0 : i32, i32
  }
  func.func @transform_6(%arg0: i32) -> (i32, i32) {
    %c0_i32 = arith.constant 0 : i32
    %c0_i32_0 = arith.constant 0 : i32
    %c0_i32_1 = arith.constant 0 : i32
    return %c0_i32, %c0_i32_0 : i32, i32
  }
  func.func @transform_7(%arg0: i32) -> (i32, i32) {
    %c0_i32 = arith.constant 0 : i32
    %c0_i32_0 = arith.constant 0 : i32
    return %arg0, %c0_i32 : i32, i32
  }
}

</mosaic_0001>

<llo_original>
// kernel: critic_net_forward.1
$region0: #{critic_net_forward.1}
  #allocation0 [shape = 'u32[]', space=smem, size = 0x4, offset = 0x4, fixed_abs, tag = 'smem constant byte address 0x4 - core index']
  #allocation1 [shape = 'u32[72,128]{1,0:T(1,128)}', space=vmem, size = 0x9000, scoped, tag = 'internal scratch']
  %s0 = inlined_call_operand.vmem [shape: f32[16,16], index: 0, kind: input, shape index: {}]
  %s1 = inlined_call_operand.vmem [shape: bf16[16,128], index: 1, kind: input, shape index: {}]
  %s2 = inlined_call_operand.vmem [shape: f32[1,128], index: 2, kind: input, shape index: {}]
  %s3 = inlined_call_operand.vmem [shape: bf16[128,128], index: 3, kind: input, shape index: {}]
  %s4 = inlined_call_operand.vmem [shape: f32[1,128], index: 4, kind: input, shape index: {}]
  %s5 = inlined_call_operand.vmem [shape: bf16[128,4], index: 5, kind: input, shape index: {}]
  %s6 = inlined_call_operand.vmem [shape: f32[1,4], index: 6, kind: input, shape index: {}]
  %s7 = inlined_call_operand.vmem [shape: f32[16,4], index: 7, kind: output, shape index: {}]
  %s8 = sld [smem:[#allocation0]]
  $region38: #{critic_net_forward.1} parent=0
    _
  %s10 = ssub.s32 1, %s8
  %s11 = scalar_select 0, %s10, %s8
  // Predicated region
  $region2: #{critic_net_forward.1} parent=0 // pred_check
    _
  $region3: #{critic_net_forward.1} parent=0 // pred_check_branch
    %13 = sbr.rel (0) target = $region5
  $region4: #{critic_net_forward.1} parent=0 // pred_region
    _
  $region5: #{critic_net_forward.1} parent=0 // pred_fallthru
    _
  // Predicated region
  $region6: #{critic_net_forward.1} parent=0 // pred_check
    _
  $region7: #{critic_net_forward.1} parent=0 // pred_check_branch
    %15 = sbr.rel (0) target = $region9
  $region8: #{critic_net_forward.1} parent=0 // pred_region
    _
  $region9: #{critic_net_forward.1} parent=0 // pred_fallthru
    _
  // Predicated region
  $region10: #{critic_net_forward.1} parent=0 // pred_check
    _
  $region11: #{critic_net_forward.1} parent=0 // pred_check_branch
    %17 = sbr.rel (0) target = $region13
  $region12: #{critic_net_forward.1} parent=0 // pred_region
    _
  $region13: #{critic_net_forward.1} parent=0 // pred_fallthru
    _
  // Predicated region
  $region14: #{critic_net_forward.1} parent=0 // pred_check
    _
  $region15: #{critic_net_forward.1} parent=0 // pred_check_branch
    %19 = sbr.rel (0) target = $region17
  $region16: #{critic_net_forward.1} parent=0 // pred_region
    _
  $region17: #{critic_net_forward.1} parent=0 // pred_fallthru
    _
  // Predicated region
  $region18: #{critic_net_forward.1} parent=0 // pred_check
    _
  $region19: #{critic_net_forward.1} parent=0 // pred_check_branch
    %21 = sbr.rel (0) target = $region21
  $region20: #{critic_net_forward.1} parent=0 // pred_region
    _
  $region21: #{critic_net_forward.1} parent=0 // pred_fallthru
    _
  // Predicated region
  $region22: #{critic_net_forward.1} parent=0 // pred_check
    _
  $region23: #{critic_net_forward.1} parent=0 // pred_check_branch
    %23 = sbr.rel (0) target = $region25
  $region24: #{critic_net_forward.1} parent=0 // pred_region
    _
  $region25: #{critic_net_forward.1} parent=0 // pred_fallthru
    _
  // Predicated region
  $region26: #{critic_net_forward.1} parent=0 // pred_check
    _
  $region27: #{critic_net_forward.1} parent=0 // pred_check_branch
    %25 = sbr.rel (0) target = $region29
  $region28: #{critic_net_forward.1} parent=0 // pred_region
    _
  $region29: #{critic_net_forward.1} parent=0 // pred_fallthru
    _
  %v27 = vld [vmem:[%s0] sm:$0xff]
  %v28 = vld [vmem:[%s0 + $0x8] sm:$0xff]
  %v29 = vpack.c.bf16 %v28, %v27
  %v30 = vld [vmem:[%s1] sm:$0xf]
  %v31 = vld [vmem:[%s1 + $0x4] sm:$0xf]
  %v32 = vld [vmem:[%s2] sm:$0x1]
  %v34 = vperm.slane %v32, 0
  %v38 = vunpack.c.l.b16 %v30
  %v39 = vunpack.c.l.b16 %v31
  %v40 = vpack.c.b16 %v39, %v38
  %vm42 = vcmask 130048
  %v44 = vsel %vm42, %v29, 0
  %46 = vmatpush.bf16.msra.mxu0 0
  %47 = vmatpush.bf16.msra.mxu0 0
  %48 = vmatpush.bf16.msra.mxu0 0
  %49 = vmatpush.bf16.msra.mxu0 0
  %50 = vmatpush.bf16.msra.mxu0 0
  %51 = vmatpush.bf16.msra.mxu0 0
  %52 = vmatpush.bf16.msra.mxu0 0
  %53 = vmatpush.bf16.msra.mxu0 %v40
  %54 = vmatmul.bf16.gmra.mxu0 %v44
  %v55 = vpop.f32.mrf.mxu0
  %v56 = vadd.f32 %v34, %v55
  %v57 = vpop.f32.mrf.mxu0
  %v58 = vadd.f32 %v34, %v57
  %59 = vdwg.mxu0
  %v60 = vmax.f32 %v56, 0.0
  %v61 = vmax.f32 %v58, 0.0
  %v62 = vpack.c.bf16 %v61, %v60
  %v63 = vld [vmem:[%s3] sm:$0xf]
  %v64 = vld [vmem:[%s3 + $0x4] sm:$0xf]
  %v65 = vld [vmem:[%s3 + $0x8] sm:$0xf]
  %v66 = vld [vmem:[%s3 + $0xc] sm:$0xf]
  %v67 = vld [vmem:[%s3 + $0x10] sm:$0xf]
  %v68 = vld [vmem:[%s3 + $0x14] sm:$0xf]
  %v69 = vld [vmem:[%s3 + $0x18] sm:$0xf]
  %v70 = vld [vmem:[%s3 + $0x1c] sm:$0xf]
  %v71 = vld [vmem:[%s3 + $0x20] sm:$0xf]
  %v72 = vld [vmem:[%s3 + $0x24] sm:$0xf]
  %v73 = vld [vmem:[%s3 + $0x28] sm:$0xf]
  %v74 = vld [vmem:[%s3 + $0x2c] sm:$0xf]
  %v75 = vld [vmem:[%s3 + $0x30] sm:$0xf]
  %v76 = vld [vmem:[%s3 + $0x34] sm:$0xf]
  %v77 = vld [vmem:[%s3 + $0x38] sm:$0xf]
  %v78 = vld [vmem:[%s3 + $0x3c] sm:$0xf]
  %v79 = vld [vmem:[%s4] sm:$0x1]
  %v81 = vperm.slane %v79, 0
  %v99 = vunpack.c.l.b16 %v63
  %v100 = vunpack.c.l.b16 %v64
  %v101 = vunpack.c.l.b16 %v65
  %v102 = vunpack.c.l.b16 %v66
  %v103 = vunpack.c.l.b16 %v67
  %v104 = vunpack.c.l.b16 %v68
  %v105 = vunpack.c.l.b16 %v69
  %v106 = vunpack.c.l.b16 %v70
  %v107 = vunpack.c.l.b16 %v71
  %v108 = vunpack.c.l.b16 %v72
  %v109 = vunpack.c.l.b16 %v73
  %v110 = vunpack.c.l.b16 %v74
  %v111 = vunpack.c.l.b16 %v75
  %v112 = vunpack.c.l.b16 %v76
  %v113 = vunpack.c.l.b16 %v77
  %v114 = vunpack.c.l.b16 %v78
  %v115 = vpack.c.b16 %v100, %v99
  %v116 = vpack.c.b16 %v102, %v101
  %v117 = vpack.c.b16 %v104, %v103
  %v118 = vpack.c.b16 %v106, %v105
  %v119 = vpack.c.b16 %v108, %v107
  %v120 = vpack.c.b16 %v110, %v109
  %v121 = vpack.c.b16 %v112, %v111
  %v122 = vpack.c.b16 %v114, %v113
  %131 = vmatpush.bf16.msra.mxu0 %v122
  %132 = vmatpush.bf16.msra.mxu0 %v121
  %133 = vmatpush.bf16.msra.mxu0 %v120
  %134 = vmatpush.bf16.msra.mxu0 %v119
  %135 = vmatpush.bf16.msra.mxu0 %v118
  %136 = vmatpush.bf16.msra.mxu0 %v117
  %137 = vmatpush.bf16.msra.mxu0 %v116
  %138 = vmatpush.bf16.msra.mxu0 %v115
  %139 = vmatmul.bf16.gmra.mxu0 %v62
  %v140 = vpop.f32.mrf.mxu0
  %v141 = vadd.f32 %v81, %v140
  %v142 = vpop.f32.mrf.mxu0
  %v143 = vadd.f32 %v81, %v142
  %144 = vdwg.mxu0
  %v145 = vmax.f32 %v141, 0.0
  %v146 = vmax.f32 %v143, 0.0
  %v147 = vpack.c.bf16 %v146, %v145
  %v148 = vld [vmem:[%s5] sm:$0xf]
  %v149 = vld [vmem:[%s5 + $0x4] sm:$0xf]
  %v150 = vld [vmem:[%s5 + $0x8] sm:$0xf]
  %v151 = vld [vmem:[%s5 + $0xc] sm:$0xf]
  %v152 = vld [vmem:[%s5 + $0x10] sm:$0xf]
  %v153 = vld [vmem:[%s5 + $0x14] sm:$0xf]
  %v154 = vld [vmem:[%s5 + $0x18] sm:$0xf]
  %v155 = vld [vmem:[%s5 + $0x1c] sm:$0xf]
  %v156 = vld [vmem:[%s5 + $0x20] sm:$0xf]
  %v157 = vld [vmem:[%s5 + $0x24] sm:$0xf]
  %v158 = vld [vmem:[%s5 + $0x28] sm:$0xf]
  %v159 = vld [vmem:[%s5 + $0x2c] sm:$0xf]
  %v160 = vld [vmem:[%s5 + $0x30] sm:$0xf]
  %v161 = vld [vmem:[%s5 + $0x34] sm:$0xf]
  %v162 = vld [vmem:[%s5 + $0x38] sm:$0xf]
  %v163 = vld [vmem:[%s5 + $0x3c] sm:$0xf]
  %v164 = vld [vmem:[%s6] sm:$0x1]
  %v166 = vperm.slane %v164, 0
  %v184 = vunpack.c.l.b16 %v148
  %v185 = vunpack.c.l.b16 %v149
  %v186 = vunpack.c.l.b16 %v150
  %v187 = vunpack.c.l.b16 %v151
  %v188 = vunpack.c.l.b16 %v152
  %v189 = vunpack.c.l.b16 %v153
  %v190 = vunpack.c.l.b16 %v154
  %v191 = vunpack.c.l.b16 %v155
  %v192 = vunpack.c.l.b16 %v156
  %v193 = vunpack.c.l.b16 %v157
  %v194 = vunpack.c.l.b16 %v158
  %v195 = vunpack.c.l.b16 %v159
  %v196 = vunpack.c.l.b16 %v160
  %v197 = vunpack.c.l.b16 %v161
  %v198 = vunpack.c.l.b16 %v162
  %v199 = vunpack.c.l.b16 %v163
  %v200 = vpack.c.b16 %v185, %v184
  %v201 = vpack.c.b16 %v187, %v186
  %v202 = vpack.c.b16 %v189, %v188
  %v203 = vpack.c.b16 %v191, %v190
  %v204 = vpack.c.b16 %v193, %v192
  %v205 = vpack.c.b16 %v195, %v194
  %v206 = vpack.c.b16 %v197, %v196
  %v207 = vpack.c.b16 %v199, %v198
  %216 = vmatpush.bf16.msra.mxu0 %v207
  %217 = vmatpush.bf16.msra.mxu0 %v206
  %218 = vmatpush.bf16.msra.mxu0 %v205
  %219 = vmatpush.bf16.msra.mxu0 %v204
  %220 = vmatpush.bf16.msra.mxu0 %v203
  %221 = vmatpush.bf16.msra.mxu0 %v202
  %222 = vmatpush.bf16.msra.mxu0 %v201
  %223 = vmatpush.bf16.msra.mxu0 %v200
  %224 = vmatmul.bf16.gmra.mxu0 %v147
  %v225 = vpop.f32.mrf.mxu0
  %v226 = vadd.f32 %v166, %v225
  %v227 = vpop.f32.mrf.mxu0
  %v228 = vadd.f32 %v166, %v227
  %229 = vdwg.mxu0
  %vm230 = vcmask 31744
  %231 = vst.msk [vmem:[%s7] sm:$0xff] %vm230, %v226
  %232 = vst.msk [vmem:[%s7 + $0x8] sm:$0xff] %vm230, %v228
  // Predicated region
  $region30: #{critic_net_forward.1} parent=0 // pred_check
    _
  $region31: #{critic_net_forward.1} parent=0 // pred_check_branch
    %234 = sbr.rel (0) target = $region33
  $region32: #{critic_net_forward.1} parent=0 // pred_region
    _
  $region33: #{critic_net_forward.1} parent=0 // pred_fallthru
    _
  // Predicated region
  $region34: #{critic_net_forward.1} parent=0 // pred_check
    _
  $region35: #{critic_net_forward.1} parent=0 // pred_check_branch
    %236 = sbr.rel (0) target = $region37
  $region36: #{critic_net_forward.1} parent=0 // pred_region
    _
  $region37: #{critic_net_forward.1} parent=0 // pred_fallthru
    _

</llo_original>
